<compile_context>
chip_gen: v7x
topology: tpu7x:2x2x1
jax: 0.10.0
libtpu: 0.0.40
codegen_flags: <defaults>
</compile_context>

<pallas_src>
import functools

import jax
import jax.numpy as jnp
from jax.experimental import pallas as pl
from jax.experimental.pallas import tpu as pltpu

DIM1 = 20                         # hidden width hard-coded in the PyTorch module
LANE = 128
_SPLIT_BATCH = 256                # above this, keep >= 2 grid steps (v7x: 2 TCs)
_VMEM_BUDGET = 36 * 1024 * 1024   # TM-sizing budget (safe on v7x's 64 MiB/TC)
_VMEM_LIMIT = 48 * 1024 * 1024    # scoped VMEM limit: well under 64 MiB


def _round_up(n, m):
    return (n + m - 1) // m * m


def _choose_tm(B, K, F_out):
    """Batch tile (rows / grid step) sized from a generation-safe VMEM budget."""
    weights = 1 * 1024 * 1024                    # resident w1/b1/w2/b2 (tiny)
    per_row = 2 * K * 4 + 2 * F_out * 4 + 2048   # x f32 dbuf + out dbuf + temps
    tm = (_VMEM_BUDGET - weights) // per_row
    tm = max(8, min(tm, 4096))
    tm = (tm // 8) * 8                           # sublane multiple
    if B <= _SPLIT_BATCH:
        return min(B, tm)                        # tiny batch: one full tile
    # Keep at least 2 grid steps so both v7x TensorCores get work.
    return min(tm, _round_up(pl.cdiv(B, 2), 8))


# ----------------------------- Pallas kernel ------------------------------

def _two_layer_kernel(x_ref, w1_ref, b1_ref, w2_ref, b2_ref, alpha_ref, out_ref):
    # x_ref:     [TM, K]       f32  (cast to bf16 in-kernel; fused, VPU slack)
    # w1_ref:    [K, H_pad]    bf16   b1_ref: [1, H_pad]    f32
    # w2_ref:    [H_pad, F]    bf16   b2_ref: [1, F]        f32
    # alpha_ref: [1]           f32 in SMEM (PReLU shared slope)
    # out_ref:   [TM, F]       f32  (F = feat_dim, unpadded)
    a = alpha_ref[0]                                           # scalar from SMEM
    xb = x_ref[...].astype(jnp.bfloat16)                       # fused input cast
    z1 = jnp.dot(xb, w1_ref[...],
                 preferred_element_type=jnp.float32) + b1_ref[...]
    h1 = jnp.where(z1 > 0, z1, a * z1)                         # PReLU in f32
    z2 = jnp.dot(h1.astype(w2_ref.dtype), w2_ref[...],
                 preferred_element_type=jnp.float32) + b2_ref[...]
    out_ref[...] = z2.astype(out_ref.dtype)


# ------------------------------ Host wrapper ------------------------------

@functools.partial(jax.jit, static_argnames=("feat_dim",))
def two_layer_net_forward(x, padded_params, feat_dim):
    """x: any shape with leading batch dim; flattened to [B, input_size]."""
    w1p, b1p, w2p, b2p, alpha1d = padded_params
    B = x.shape[0]
    x2d = x.reshape(B, -1)                # native dtype; cast fused in kernel
    K = x2d.shape[1]
    H_pad = w1p.shape[1]
    F_out = w2p.shape[1]                  # == feat_dim (unpadded output)

    TM = _choose_tm(B, K, F_out)
    grid = (pl.cdiv(B, TM),)

    z2 = pl.pallas_call(
        _two_layer_kernel,
        out_shape=jax.ShapeDtypeStruct((B, F_out), jnp.float32),
        grid=grid,
        in_specs=[
            pl.BlockSpec((TM, K), lambda i: (i, 0)),          # x: tiled over batch
            pl.BlockSpec((K, H_pad), lambda i: (0, 0)),       # w1 resident
            pl.BlockSpec((1, H_pad), lambda i: (0, 0)),       # b1 resident
            pl.BlockSpec((H_pad, F_out), lambda i: (0, 0)),   # w2 resident
            pl.BlockSpec((1, F_out), lambda i: (0, 0)),       # b2 resident
            pl.BlockSpec(memory_space=pltpu.MemorySpace.SMEM),  # PReLU alpha (scalar)
        ],
        out_specs=pl.BlockSpec((TM, F_out), lambda i: (i, 0)),
        compiler_params=pltpu.CompilerParams(
            dimension_semantics=("parallel",),
            vmem_limit_bytes=_VMEM_LIMIT,
        ),
    )(x2d, w1p, b1p, w2p, b2p, alpha1d)

    # forward() returns (z2, z2)
    return z2, z2


# ------------------------------ Params ------------------------------------

def init_params(key, input_size, feat_dim):
    """torch.nn.Linear-style init; weights stored as [in, out]."""
    k1w, k1b, k2w, k2b = jax.random.split(key, 4)
    bound1 = 1.0 / float(jnp.sqrt(input_size))
    w1 = jax.random.uniform(k1w, (input_size, DIM1), minval=-bound1,
                            maxval=bound1, dtype=jnp.float32)
    b1 = jax.random.uniform(k1b, (1, DIM1), minval=-bound1,
                            maxval=bound1, dtype=jnp.float32)
    bound2 = 1.0 / float(jnp.sqrt(DIM1))
    w2 = jax.random.uniform(k2w, (DIM1, feat_dim), minval=-bound2,
                            maxval=bound2, dtype=jnp.float32)
    b2 = jax.random.uniform(k2b, (1, feat_dim), minval=-bound2,
                            maxval=bound2, dtype=jnp.float32)
    alpha = jnp.float32(0.25)   # nn.PReLU() default: single shared slope = 0.25
    return (w1, b1, w2, b2, alpha)


def pad_params_for_kernel(params, input_size, feat_dim):
    """Pad only the hidden width (20 -> 128) for lane-dense intermediates.

    Padded hidden columns have zero weight + zero bias and PReLU(0)=0, and the
    corresponding w2 rows are zero, so valid outputs are unaffected.  K (input)
    and feat_dim (output) stay unpadded — Mosaic pads the contraction and the
    32-lane masked store is free, saving whole HBM passes in the wrapper.
    """
    w1, b1, w2, b2, alpha = params
    H_pad = _round_up(DIM1, LANE)
    w1p = jnp.zeros((input_size, H_pad), jnp.bfloat16).at[:, :DIM1].set(
        w1.astype(jnp.bfloat16))
    b1p = jnp.zeros((1, H_pad), jnp.float32).at[:, :DIM1].set(b1)
    w2p = jnp.zeros((H_pad, feat_dim), jnp.bfloat16).at[:DIM1, :].set(
        w2.astype(jnp.bfloat16))
    b2p = b2.astype(jnp.float32)
    alpha1d = jnp.full((1,), alpha, dtype=jnp.float32)
    return (w1p, b1p, w2p, b2p, alpha1d)


# ------------------------------ Reference ---------------------------------

def reference_forward(x, params):
    """Pure-JAX reference, mirroring the kernel's bf16 operand precision."""
    w1, b1, w2, b2, alpha = params
    bf = lambda a: a.astype(jnp.bfloat16).astype(jnp.float32)
    h = x.reshape(x.shape[0], -1)
    z1 = bf(h) @ bf(w1) + b1
    h1 = jnp.where(z1 > 0, z1, alpha * z1)
    z2 = bf(h1) @ bf(w2) + b2
    return z2, z2


# -------------------------------- Main -------------------------------------

if __name__ == "__main__":
    key = jax.random.PRNGKey(0)
    kx, kp, kx2 = jax.random.split(key, 3)

    # Small shapes: batch=2, image [4, 16, 16] -> input_size = 4*16*16 = 1024
    B, C, H, W = 2, 4, 16, 16
    input_size = C * H * W
    feat_dim = 32
    num_classes = 10  # unused in forward (kept for API parity with the module)

    x = jax.random.normal(kx, (B, C, H, W), dtype=jnp.float32)
    params = init_params(kp, input_size, feat_dim)
    padded_params = pad_params_for_kernel(params, input_size, feat_dim)

    out, out_dup = two_layer_net_forward(x, padded_params, feat_dim=feat_dim)
    jax.block_until_ready(out)

    ref, _ = reference_forward(x, params)
    assert out.shape == (B, feat_dim)
    assert jnp.allclose(out, ref, atol=2e-3, rtol=2e-3), "mismatch vs reference"
    assert jnp.array_equal(out, out_dup)

    # Non-divisible batch (B % TM != 0): exercises the masked last grid step.
    B2 = 600
    x2 = jax.random.normal(kx2, (B2, C, H, W), dtype=jnp.float32)
    out2, _ = two_layer_net_forward(x2, padded_params, feat_dim=feat_dim)
    jax.block_until_ready(out2)
    ref2, _ = reference_forward(x2, params)
    assert out2.shape == (B2, feat_dim)
    assert jnp.allclose(out2, ref2, atol=2e-3, rtol=2e-3), "mismatch (ragged B)"

    print("KERNEL_OK")
</pallas_src>

<mosaic_0001>
module attributes {stable_mosaic.version = 11 : i64} {
  func.func @_two_layer_kernel(%arg0: i32, %arg1: memref<2x1024xf32, #tpu.memory_space<vmem>>, %arg2: memref<1024x128xbf16, #tpu.memory_space<vmem>>, %arg3: memref<1x128xf32, #tpu.memory_space<vmem>>, %arg4: memref<128x32xbf16, #tpu.memory_space<vmem>>, %arg5: memref<1x32xf32, #tpu.memory_space<vmem>>, %arg6: memref<1xf32, #tpu.memory_space<smem>>, %arg7: memref<2x32xf32, #tpu.memory_space<vmem>>) attributes {dimension_semantics = [#tpu.dimension_semantics<parallel>], iteration_bounds = array<i64: 1>, scalar_prefetch = 0 : i64, scratch_operands = 0 : i64, tpu.core_type = #tpu.core_type<tc>, window_params = [{transform_indices = @transform_0, window_bounds = array<i64: 2, 1024>}, {pipeline_mode = #tpu.pipeline_mode<synchronous>, transform_indices = @transform_1, window_bounds = array<i64: 1024, 128>}, {pipeline_mode = #tpu.pipeline_mode<synchronous>, transform_indices = @transform_2, window_bounds = array<i64: 1, 128>}, {pipeline_mode = #tpu.pipeline_mode<synchronous>, transform_indices = @transform_3, window_bounds = array<i64: 128, 32>}, {pipeline_mode = #tpu.pipeline_mode<synchronous>, transform_indices = @transform_4, window_bounds = array<i64: 1, 32>}, {transform_indices = @transform_5, window_bounds = array<i64: 1>}, {transform_indices = @transform_6, window_bounds = array<i64: 2, 32>}]} {
    %c0 = arith.constant 0 : index
    %0 = memref.load %arg6[%c0] : memref<1xf32, #tpu.memory_space<smem>>
    %c0_0 = arith.constant 0 : index
    %c0_1 = arith.constant 0 : index
    %1 = vector.load %arg1[%c0_0, %c0_1] : memref<2x1024xf32, #tpu.memory_space<vmem>>, vector<2x1024xf32>
    %2 = arith.truncf %1 : vector<2x1024xf32> to vector<2x1024xbf16>
    %c0_2 = arith.constant 0 : index
    %c0_3 = arith.constant 0 : index
    %3 = vector.load %arg2[%c0_2, %c0_3] : memref<1024x128xbf16, #tpu.memory_space<vmem>>, vector<1024x128xbf16>
    %cst = arith.constant dense<0.000000e+00> : vector<2x128xf32>
    %4 = tpu.matmul %2, %3, %cst {dimension_numbers = #tpu.dot_dimension_numbers<[1], [0], [0], [1], [0, 0, 1, 1], [], []>} : vector<2x1024xbf16>, vector<1024x128xbf16>, vector<2x128xf32> -> vector<2x128xf32>
    %c0_4 = arith.constant 0 : index
    %c0_5 = arith.constant 0 : index
    %5 = vector.load %arg3[%c0_4, %c0_5] : memref<1x128xf32, #tpu.memory_space<vmem>>, vector<1x128xf32>
    %6 = vector.broadcast %5 : vector<1x128xf32> to vector<2x128xf32>
    %7 = arith.addf %4, %6 : vector<2x128xf32>
    %cst_6 = arith.constant 0.000000e+00 : f32
    %8 = vector.broadcast %cst_6 : f32 to vector<2x128xf32>
    %9 = arith.cmpf ogt, %7, %8 : vector<2x128xf32>
    %10 = vector.broadcast %0 : f32 to vector<2x128xf32>
    %11 = arith.mulf %10, %7 : vector<2x128xf32>
    %12 = arith.select %9, %7, %11 : vector<2x128xi1>, vector<2x128xf32>
    %13 = arith.truncf %12 : vector<2x128xf32> to vector<2x128xbf16>
    %c0_7 = arith.constant 0 : index
    %c0_8 = arith.constant 0 : index
    %14 = vector.load %arg4[%c0_7, %c0_8] : memref<128x32xbf16, #tpu.memory_space<vmem>>, vector<128x32xbf16>
    %cst_9 = arith.constant dense<0.000000e+00> : vector<2x32xf32>
    %15 = tpu.matmul %13, %14, %cst_9 {dimension_numbers = #tpu.dot_dimension_numbers<[1], [0], [0], [1], [0, 0, 1, 1], [], []>} : vector<2x128xbf16>, vector<128x32xbf16>, vector<2x32xf32> -> vector<2x32xf32>
    %c0_10 = arith.constant 0 : index
    %c0_11 = arith.constant 0 : index
    %16 = vector.load %arg5[%c0_10, %c0_11] : memref<1x32xf32, #tpu.memory_space<vmem>>, vector<1x32xf32>
    %17 = vector.broadcast %16 : vector<1x32xf32> to vector<2x32xf32>
    %18 = arith.addf %15, %17 : vector<2x32xf32>
    %c0_12 = arith.constant 0 : index
    %c0_13 = arith.constant 0 : index
    %19 = vector.load %arg7[%c0_12, %c0_13] : memref<2x32xf32, #tpu.memory_space<vmem>>, vector<2x32xf32>
    tpu.vector_store %arg7[%c0_12, %c0_13], %18 {strides = array<i32>} : memref<2x32xf32, #tpu.memory_space<vmem>>, vector<2x32xf32>,
    return
  }
  func.func @transform_0(%arg0: i32) -> (i32, i32) {
    %c0_i32 = arith.constant 0 : i32
    %c0_i32_0 = arith.constant 0 : i32
    return %arg0, %c0_i32 : i32, i32
  }
  func.func @transform_1(%arg0: i32) -> (i32, i32) {
    %c0_i32 = arith.constant 0 : i32
    %c0_i32_0 = arith.constant 0 : i32
    %c0_i32_1 = arith.constant 0 : i32
    return %c0_i32, %c0_i32_0 : i32, i32
  }
  func.func @transform_2(%arg0: i32) -> (i32, i32) {
    %c0_i32 = arith.constant 0 : i32
    %c0_i32_0 = arith.constant 0 : i32
    %c0_i32_1 = arith.constant 0 : i32
    return %c0_i32, %c0_i32_0 : i32, i32
  }
  func.func @transform_3(%arg0: i32) -> (i32, i32) {
    %c0_i32 = arith.constant 0 : i32
    %c0_i32_0 = arith.constant 0 : i32
    %c0_i32_1 = arith.constant 0 : i32
    return %c0_i32, %c0_i32_0 : i32, i32
  }
  func.func @transform_4(%arg0: i32) -> (i32, i32) {
    %c0_i32 = arith.constant 0 : i32
    %c0_i32_0 = arith.constant 0 : i32
    %c0_i32_1 = arith.constant 0 : i32
    return %c0_i32, %c0_i32_0 : i32, i32
  }
  func.func @transform_5(%arg0: i32) -> i32 {
    %c0_i32 = arith.constant 0 : i32
    %c0_i32_0 = arith.constant 0 : i32
    return %c0_i32 : i32
  }
  func.func @transform_6(%arg0: i32) -> (i32, i32) {
    %c0_i32 = arith.constant 0 : i32
    %c0_i32_0 = arith.constant 0 : i32
    return %arg0, %c0_i32 : i32, i32
  }
}

</mosaic_0001>

<llo_original>
// kernel: two_layer_net_forward.1
$region0: #{two_layer_net_forward.1}
  #allocation0 [shape = 'u32[]', space=smem, size = 0x4, offset = 0x4, fixed_abs, tag = 'smem constant byte address 0x4 - core index']
  #allocation1 [shape = 'u32[144,128]{1,0:T(1,128)}', space=vmem, size = 0x12000, scoped, tag = 'internal scratch']
  #allocation2 [shape = 'f32[1]{0:T(128)S(6)}', space=smem, size = 0x200, scoped, tag = 'scoped memory for two_layer_net_forward.1']
  %s0 = inlined_call_operand.vmem [shape: f32[2,1024], index: 0, kind: input, shape index: {}]
  %s1 = inlined_call_operand.hbm [shape: bf16[1024,128], index: 1, kind: input, shape index: {}]
  %s2 = inlined_call_operand.vmem [shape: f32[1,128], index: 2, kind: input, shape index: {}]
  %s3 = inlined_call_operand.vmem [shape: bf16[128,32], index: 3, kind: input, shape index: {}]
  %s4 = inlined_call_operand.vmem [shape: f32[1,32], index: 4, kind: input, shape index: {}]
  %s5 = inlined_call_operand.<no memory space> [shape: f32[1], index: 5, kind: input, shape index: {}]
  %s6 = inlined_call_operand.vmem [shape: f32[2,32], index: 6, kind: output, shape index: {}]
  %s7 = sld [smem:[#allocation0]]
  $region38: #{two_layer_net_forward.1} parent=0
    _
  %s9 = ssub.s32 1, %s7
  %s10 = scalar_select 0, %s9, %s7
  %11 = sst [smem:[#allocation2]] %s5
  $region1: #{two_layer_net_forward.1} parent=0
    #allocation3 [shape = 'u8[262144]{0}', space=vmem, size = 0x40000, scoped, tag = 'input window, operand 1, single buffered']
    #allocation4 [shape = 's32[1]{0}', space=sflag, size = 0x4, scoped, tag = 'scoped memory for two_layer_net_forward.1']
    %12 = vsyncpa [#allocation4], 0
    // Predicated region
    $region2: #{two_layer_net_forward.1} parent=1 // pred_check
      _
    $region3: #{two_layer_net_forward.1} parent=1 // pred_check_branch
      %14 = sbr.rel (0) target = $region5
    $region4: #{two_layer_net_forward.1} parent=1 // pred_region
      _
    $region5: #{two_layer_net_forward.1} parent=1 // pred_fallthru
      _
    // Predicated region
    $region6: #{two_layer_net_forward.1} parent=1 // pred_check
      _
    $region7: #{two_layer_net_forward.1} parent=1 // pred_check_branch
      %16 = sbr.rel (0) target = $region9
    $region8: #{two_layer_net_forward.1} parent=1 // pred_region
      %s18 = ssub.s32 8192, 8192
      %19 = vsyncadd [#allocation4], %s18
      %s20 = sshll.u32 [#allocation3], 4
      %s21 = int_to_ptr.vmem [resolvable:$true] %s20
      %26 = dma.hbm_to_vmem [thread:$0]  %s1, 8192, %s21, [#allocation4], 64, 64, 4
    $region9: #{two_layer_net_forward.1} parent=1 // pred_fallthru
      _
    // Predicated region
    $region10: #{two_layer_net_forward.1} parent=1 // pred_check
      _
    $region11: #{two_layer_net_forward.1} parent=1 // pred_check_branch
      %28 = sbr.rel (0) target = $region13
    $region12: #{two_layer_net_forward.1} parent=1 // pred_region
      _
    $region13: #{two_layer_net_forward.1} parent=1 // pred_fallthru
      _
    // Predicated region
    $region14: #{two_layer_net_forward.1} parent=1 // pred_check
      _
    $region15: #{two_layer_net_forward.1} parent=1 // pred_check_branch
      %30 = sbr.rel (0) target = $region17
    $region16: #{two_layer_net_forward.1} parent=1 // pred_region
      _
    $region17: #{two_layer_net_forward.1} parent=1 // pred_fallthru
      _
    // Predicated region
    $region18: #{two_layer_net_forward.1} parent=1 // pred_check
      _
    $region19: #{two_layer_net_forward.1} parent=1 // pred_check_branch
      %32 = sbr.rel (0) target = $region21
    $region20: #{two_layer_net_forward.1} parent=1 // pred_region
      _
    $region21: #{two_layer_net_forward.1} parent=1 // pred_fallthru
      _
    // Predicated region
    $region22: #{two_layer_net_forward.1} parent=1 // pred_check
      _
    $region23: #{two_layer_net_forward.1} parent=1 // pred_check_branch
      %34 = sbr.rel (0) target = $region25
    $region24: #{two_layer_net_forward.1} parent=1 // pred_region
      _
    $region25: #{two_layer_net_forward.1} parent=1 // pred_fallthru
      _
    // Predicated region
    $region26: #{two_layer_net_forward.1} parent=1 // pred_check
      _
    $region27: #{two_layer_net_forward.1} parent=1 // pred_check_branch
      %36 = sbr.rel (0) target = $region29
    $region28: #{two_layer_net_forward.1} parent=1 // pred_region
      %37 = dma.done [#allocation4], 8192
    $region29: #{two_layer_net_forward.1} parent=1 // pred_fallthru
      _
    %s39 = sld [smem:[#allocation2]]
    %v40 = vld [vmem:[%s0] sm:$0xff]
    %v41 = vld [vmem:[%s0 + $0x8] sm:$0xff]
    %v44 = vcombine.high %v40, %v40
    %v46 = vunpack.c.l.s4 1983009808
    %v47 = vunpack.c.0.s8 %v46
    %v48 = vlaneseq
    %v49 = vshrl.u32 %v48, 7
    %v50 = vsub.s32 %v47, %v49
    %v51 = vrot.slane %v40, %v50
    %v53 = vunpack.c.l.s4 1983009808
    %v54 = vunpack.c.0.s8 %v53
    %v55 = vlaneseq
    %v56 = vshrl.u32 %v55, 7
    %v57 = vsub.s32 %v54, %v56
    %v58 = vrot.slane %v44, %v57
    %v59 = vcombine.high %v51, %v51
    %v60 = vcombine.high %v58, %v58
    %v61 = vcombine.high %v41, %v41
    %v63 = vunpack.c.l.s4 1983009808
    %v64 = vunpack.c.0.s8 %v63
    %v65 = vlaneseq
    %v66 = vshrl.u32 %v65, 7
    %v67 = vsub.s32 %v64, %v66
    %v68 = vrot.slane %v41, %v67
    %v70 = vunpack.c.l.s4 1983009808
    %v71 = vunpack.c.0.s8 %v70
    %v72 = vlaneseq
    %v73 = vshrl.u32 %v72, 7
    %v74 = vsub.s32 %v71, %v73
    %v75 = vrot.slane %v61, %v74
    %v76 = vcombine.high %v68, %v68
    %v77 = vcombine.high %v75, %v75
    %v86 = vpack.c.bf16 %v51, %v51
    %v87 = vpack.c.bf16 %v59, %v59
    %v88 = vpack.c.bf16 %v58, %v58
    %v89 = vpack.c.bf16 %v60, %v60
    %v90 = vpack.c.bf16 %v68, %v68
    %v91 = vpack.c.bf16 %v76, %v76
    %v92 = vpack.c.bf16 %v75, %v75
    %v93 = vpack.c.bf16 %v77, %v77
    %v94 = vld [vmem:[#allocation3] sm:$0xf]
    %v95 = vld [vmem:[#allocation3 + $0x4] sm:$0xf]
    %v96 = vld [vmem:[#allocation3 + $0x8] sm:$0xf]
    %v97 = vld [vmem:[#allocation3 + $0xc] sm:$0xf]
    %v98 = vld [vmem:[#allocation3 + $0x10] sm:$0xf]
    %v99 = vld [vmem:[#allocation3 + $0x14] sm:$0xf]
    %v100 = vld [vmem:[#allocation3 + $0x18] sm:$0xf]
    %v101 = vld [vmem:[#allocation3 + $0x1c] sm:$0xf]
    %v102 = vld [vmem:[#allocation3 + $0x20] sm:$0xf]
    %v103 = vld [vmem:[#allocation3 + $0x24] sm:$0xf]
    %v104 = vld [vmem:[#allocation3 + $0x28] sm:$0xf]
    %v105 = vld [vmem:[#allocation3 + $0x2c] sm:$0xf]
    %v106 = vld [vmem:[#allocation3 + $0x30] sm:$0xf]
    %v107 = vld [vmem:[#allocation3 + $0x34] sm:$0xf]
    %v108 = vld [vmem:[#allocation3 + $0x38] sm:$0xf]
    %v109 = vld [vmem:[#allocation3 + $0x3c] sm:$0xf]
    %v110 = vld [vmem:[#allocation3 + $0x40] sm:$0xf]
    %v111 = vld [vmem:[#allocation3 + $0x44] sm:$0xf]
    %v112 = vld [vmem:[#allocation3 + $0x48] sm:$0xf]
    %v113 = vld [vmem:[#allocation3 + $0x4c] sm:$0xf]
    %v114 = vld [vmem:[#allocation3 + $0x50] sm:$0xf]
    %v115 = vld [vmem:[#allocation3 + $0x54] sm:$0xf]
    %v116 = vld [vmem:[#allocation3 + $0x58] sm:$0xf]
    %v117 = vld [vmem:[#allocation3 + $0x5c] sm:$0xf]
    %v118 = vld [vmem:[#allocation3 + $0x60] sm:$0xf]
    %v119 = vld [vmem:[#allocation3 + $0x64] sm:$0xf]
    %v120 = vld [vmem:[#allocation3 + $0x68] sm:$0xf]
    %v121 = vld [vmem:[#allocation3 + $0x6c] sm:$0xf]
    %v122 = vld [vmem:[#allocation3 + $0x70] sm:$0xf]
    %v123 = vld [vmem:[#allocation3 + $0x74] sm:$0xf]
    %v124 = vld [vmem:[#allocation3 + $0x78] sm:$0xf]
    %v125 = vld [vmem:[#allocation3 + $0x7c] sm:$0xf]
    %v126 = vld [vmem:[#allocation3 + $0x80] sm:$0xf]
    %v127 = vld [vmem:[#allocation3 + $0x84] sm:$0xf]
    %v128 = vld [vmem:[#allocation3 + $0x88] sm:$0xf]
    %v129 = vld [vmem:[#allocation3 + $0x8c] sm:$0xf]
    %v130 = vld [vmem:[#allocation3 + $0x90] sm:$0xf]
    %v131 = vld [vmem:[#allocation3 + $0x94] sm:$0xf]
    %v132 = vld [vmem:[#allocation3 + $0x98] sm:$0xf]
    %v133 = vld [vmem:[#allocation3 + $0x9c] sm:$0xf]
    %v134 = vld [vmem:[#allocation3 + $0xa0] sm:$0xf]
    %v135 = vld [vmem:[#allocation3 + $0xa4] sm:$0xf]
    %v136 = vld [vmem:[#allocation3 + $0xa8] sm:$0xf]
    %v137 = vld [vmem:[#allocation3 + $0xac] sm:$0xf]
    %v138 = vld [vmem:[#allocation3 + $0xb0] sm:$0xf]
    %v139 = vld [vmem:[#allocation3 + $0xb4] sm:$0xf]
    %v140 = vld [vmem:[#allocation3 + $0xb8] sm:$0xf]
    %v141 = vld [vmem:[#allocation3 + $0xbc] sm:$0xf]
    %v142 = vld [vmem:[#allocation3 + $0xc0] sm:$0xf]
    %v143 = vld [vmem:[#allocation3 + $0xc4] sm:$0xf]
    %v144 = vld [vmem:[#allocation3 + $0xc8] sm:$0xf]
    %v145 = vld [vmem:[#allocation3 + $0xcc] sm:$0xf]
    %v146 = vld [vmem:[#allocation3 + $0xd0] sm:$0xf]
    %v147 = vld [vmem:[#allocation3 + $0xd4] sm:$0xf]
    %v148 = vld [vmem:[#allocation3 + $0xd8] sm:$0xf]
    %v149 = vld [vmem:[#allocation3 + $0xdc] sm:$0xf]
    %v150 = vld [vmem:[#allocation3 + $0xe0] sm:$0xf]
    %v151 = vld [vmem:[#allocation3 + $0xe4] sm:$0xf]
    %v152 = vld [vmem:[#allocation3 + $0xe8] sm:$0xf]
    %v153 = vld [vmem:[#allocation3 + $0xec] sm:$0xf]
    %v154 = vld [vmem:[#allocation3 + $0xf0] sm:$0xf]
    %v155 = vld [vmem:[#allocation3 + $0xf4] sm:$0xf]
    %v156 = vld [vmem:[#allocation3 + $0xf8] sm:$0xf]
    %v157 = vld [vmem:[#allocation3 + $0xfc] sm:$0xf]
    %v158 = vld [vmem:[#allocation3 + $0x100] sm:$0xf]
    %v159 = vld [vmem:[#allocation3 + $0x104] sm:$0xf]
    %v160 = vld [vmem:[#allocation3 + $0x108] sm:$0xf]
    %v161 = vld [vmem:[#allocation3 + $0x10c] sm:$0xf]
    %v162 = vld [vmem:[#allocation3 + $0x110] sm:$0xf]
    %v163 = vld [vmem:[#allocation3 + $0x114] sm:$0xf]
    %v164 = vld [vmem:[#allocation3 + $0x118] sm:$0xf]
    %v165 = vld [vmem:[#allocation3 + $0x11c] sm:$0xf]
    %v166 = vld [vmem:[#allocation3 + $0x120] sm:$0xf]
    %v167 = vld [vmem:[#allocation3 + $0x124] sm:$0xf]
    %v168 = vld [vmem:[#allocation3 + $0x128] sm:$0xf]
    %v169 = vld [vmem:[#allocation3 + $0x12c] sm:$0xf]
    %v170 = vld [vmem:[#allocation3 + $0x130] sm:$0xf]
    %v171 = vld [vmem:[#allocation3 + $0x134] sm:$0xf]
    %v172 = vld [vmem:[#allocation3 + $0x138] sm:$0xf]
    %v173 = vld [vmem:[#allocation3 + $0x13c] sm:$0xf]
    %v174 = vld [vmem:[#allocation3 + $0x140] sm:$0xf]
    %v175 = vld [vmem:[#allocation3 + $0x144] sm:$0xf]
    %v176 = vld [vmem:[#allocation3 + $0x148] sm:$0xf]
    %v177 = vld [vmem:[#allocation3 + $0x14c] sm:$0xf]
    %v178 = vld [vmem:[#allocation3 + $0x150] sm:$0xf]
    %v179 = vld [vmem:[#allocation3 + $0x154] sm:$0xf]
    %v180 = vld [vmem:[#allocation3 + $0x158] sm:$0xf]
    %v181 = vld [vmem:[#allocation3 + $0x15c] sm:$0xf]
    %v182 = vld [vmem:[#allocation3 + $0x160] sm:$0xf]
    %v183 = vld [vmem:[#allocation3 + $0x164] sm:$0xf]
    %v184 = vld [vmem:[#allocation3 + $0x168] sm:$0xf]
    %v185 = vld [vmem:[#allocation3 + $0x16c] sm:$0xf]
    %v186 = vld [vmem:[#allocation3 + $0x170] sm:$0xf]
    %v187 = vld [vmem:[#allocation3 + $0x174] sm:$0xf]
    %v188 = vld [vmem:[#allocation3 + $0x178] sm:$0xf]
    %v189 = vld [vmem:[#allocation3 + $0x17c] sm:$0xf]
    %v190 = vld [vmem:[#allocation3 + $0x180] sm:$0xf]
    %v191 = vld [vmem:[#allocation3 + $0x184] sm:$0xf]
    %v192 = vld [vmem:[#allocation3 + $0x188] sm:$0xf]
    %v193 = vld [vmem:[#allocation3 + $0x18c] sm:$0xf]
    %v194 = vld [vmem:[#allocation3 + $0x190] sm:$0xf]
    %v195 = vld [vmem:[#allocation3 + $0x194] sm:$0xf]
    %v196 = vld [vmem:[#allocation3 + $0x198] sm:$0xf]
    %v197 = vld [vmem:[#allocation3 + $0x19c] sm:$0xf]
    %v198 = vld [vmem:[#allocation3 + $0x1a0] sm:$0xf]
    %v199 = vld [vmem:[#allocation3 + $0x1a4] sm:$0xf]
    %v200 = vld [vmem:[#allocation3 + $0x1a8] sm:$0xf]
    %v201 = vld [vmem:[#allocation3 + $0x1ac] sm:$0xf]
    %v202 = vld [vmem:[#allocation3 + $0x1b0] sm:$0xf]
    %v203 = vld [vmem:[#allocation3 + $0x1b4] sm:$0xf]
    %v204 = vld [vmem:[#allocation3 + $0x1b8] sm:$0xf]
    %v205 = vld [vmem:[#allocation3 + $0x1bc] sm:$0xf]
    %v206 = vld [vmem:[#allocation3 + $0x1c0] sm:$0xf]
    %v207 = vld [vmem:[#allocation3 + $0x1c4] sm:$0xf]
    %v208 = vld [vmem:[#allocation3 + $0x1c8] sm:$0xf]
    %v209 = vld [vmem:[#allocation3 + $0x1cc] sm:$0xf]
    %v210 = vld [vmem:[#allocation3 + $0x1d0] sm:$0xf]
    %v211 = vld [vmem:[#allocation3 + $0x1d4] sm:$0xf]
    %v212 = vld [vmem:[#allocation3 + $0x1d8] sm:$0xf]
    %v213 = vld [vmem:[#allocation3 + $0x1dc] sm:$0xf]
    %v214 = vld [vmem:[#allocation3 + $0x1e0] sm:$0xf]
    %v215 = vld [vmem:[#allocation3 + $0x1e4] sm:$0xf]
    %v216 = vld [vmem:[#allocation3 + $0x1e8] sm:$0xf]
    %v217 = vld [vmem:[#allocation3 + $0x1ec] sm:$0xf]
    %v218 = vld [vmem:[#allocation3 + $0x1f0] sm:$0xf]
    %v219 = vld [vmem:[#allocation3 + $0x1f4] sm:$0xf]
    %v220 = vld [vmem:[#allocation3 + $0x1f8] sm:$0xf]
    %v221 = vld [vmem:[#allocation3 + $0x1fc] sm:$0xf]
    %v222 = vld [vmem:[%s2] sm:$0x1]
    %v224 = vlaneseq
    %v225 = vshrl.u32 %v224, 7
    %v226 = vsub.s32 0, %v225
    %v227 = vrot.slane %v222, %v226
    %v357 = vunpack.c.l.b16 %v94
    %v358 = vunpack.c.l.b16 %v95
    %v359 = vunpack.c.l.b16 %v96
    %v360 = vunpack.c.l.b16 %v97
    %v361 = vunpack.c.l.b16 %v98
    %v362 = vunpack.c.l.b16 %v99
    %v363 = vunpack.c.l.b16 %v100
    %v364 = vunpack.c.l.b16 %v101
    %v365 = vunpack.c.l.b16 %v102
    %v366 = vunpack.c.l.b16 %v103
    %v367 = vunpack.c.l.b16 %v104
    %v368 = vunpack.c.l.b16 %v105
    %v369 = vunpack.c.l.b16 %v106
    %v370 = vunpack.c.l.b16 %v107
    %v371 = vunpack.c.l.b16 %v108
    %v372 = vunpack.c.l.b16 %v109
    %v373 = vunpack.c.l.b16 %v110
    %v374 = vunpack.c.l.b16 %v111
    %v375 = vunpack.c.l.b16 %v112
    %v376 = vunpack.c.l.b16 %v113
    %v377 = vunpack.c.l.b16 %v114
    %v378 = vunpack.c.l.b16 %v115
    %v379 = vunpack.c.l.b16 %v116
    %v380 = vunpack.c.l.b16 %v117
    %v381 = vunpack.c.l.b16 %v118
    %v382 = vunpack.c.l.b16 %v119
    %v383 = vunpack.c.l.b16 %v120
    %v384 = vunpack.c.l.b16 %v121
    %v385 = vunpack.c.l.b16 %v122
    %v386 = vunpack.c.l.b16 %v123
    %v387 = vunpack.c.l.b16 %v124
    %v388 = vunpack.c.l.b16 %v125
    %v389 = vunpack.c.l.b16 %v126
    %v390 = vunpack.c.l.b16 %v127
    %v391 = vunpack.c.l.b16 %v128
    %v392 = vunpack.c.l.b16 %v129
    %v393 = vunpack.c.l.b16 %v130
    %v394 = vunpack.c.l.b16 %v131
    %v395 = vunpack.c.l.b16 %v132
    %v396 = vunpack.c.l.b16 %v133
    %v397 = vunpack.c.l.b16 %v134
    %v398 = vunpack.c.l.b16 %v135
    %v399 = vunpack.c.l.b16 %v136
    %v400 = vunpack.c.l.b16 %v137
    %v401 = vunpack.c.l.b16 %v138
    %v402 = vunpack.c.l.b16 %v139
    %v403 = vunpack.c.l.b16 %v140
    %v404 = vunpack.c.l.b16 %v141
    %v405 = vunpack.c.l.b16 %v142
    %v406 = vunpack.c.l.b16 %v143
    %v407 = vunpack.c.l.b16 %v144
    %v408 = vunpack.c.l.b16 %v145
    %v409 = vunpack.c.l.b16 %v146
    %v410 = vunpack.c.l.b16 %v147
    %v411 = vunpack.c.l.b16 %v148
    %v412 = vunpack.c.l.b16 %v149
    %v413 = vunpack.c.l.b16 %v150
    %v414 = vunpack.c.l.b16 %v151
    %v415 = vunpack.c.l.b16 %v152
    %v416 = vunpack.c.l.b16 %v153
    %v417 = vunpack.c.l.b16 %v154
    %v418 = vunpack.c.l.b16 %v155
    %v419 = vunpack.c.l.b16 %v156
    %v420 = vunpack.c.l.b16 %v157
    %v421 = vunpack.c.l.b16 %v158
    %v422 = vunpack.c.l.b16 %v159
    %v423 = vunpack.c.l.b16 %v160
    %v424 = vunpack.c.l.b16 %v161
    %v425 = vunpack.c.l.b16 %v162
    %v426 = vunpack.c.l.b16 %v163
    %v427 = vunpack.c.l.b16 %v164
    %v428 = vunpack.c.l.b16 %v165
    %v429 = vunpack.c.l.b16 %v166
    %v430 = vunpack.c.l.b16 %v167
    %v431 = vunpack.c.l.b16 %v168
    %v432 = vunpack.c.l.b16 %v169
    %v433 = vunpack.c.l.b16 %v170
    %v434 = vunpack.c.l.b16 %v171
    %v435 = vunpack.c.l.b16 %v172
    %v436 = vunpack.c.l.b16 %v173
    %v437 = vunpack.c.l.b16 %v174
    %v438 = vunpack.c.l.b16 %v175
    %v439 = vunpack.c.l.b16 %v176
    %v440 = vunpack.c.l.b16 %v177
    %v441 = vunpack.c.l.b16 %v178
    %v442 = vunpack.c.l.b16 %v179
    %v443 = vunpack.c.l.b16 %v180
    %v444 = vunpack.c.l.b16 %v181
    %v445 = vunpack.c.l.b16 %v182
    %v446 = vunpack.c.l.b16 %v183
    %v447 = vunpack.c.l.b16 %v184
    %v448 = vunpack.c.l.b16 %v185
    %v449 = vunpack.c.l.b16 %v186
    %v450 = vunpack.c.l.b16 %v187
    %v451 = vunpack.c.l.b16 %v188
    %v452 = vunpack.c.l.b16 %v189
    %v453 = vunpack.c.l.b16 %v190
    %v454 = vunpack.c.l.b16 %v191
    %v455 = vunpack.c.l.b16 %v192
    %v456 = vunpack.c.l.b16 %v193
    %v457 = vunpack.c.l.b16 %v194
    %v458 = vunpack.c.l.b16 %v195
    %v459 = vunpack.c.l.b16 %v196
    %v460 = vunpack.c.l.b16 %v197
    %v461 = vunpack.c.l.b16 %v198
    %v462 = vunpack.c.l.b16 %v199
    %v463 = vunpack.c.l.b16 %v200
    %v464 = vunpack.c.l.b16 %v201
    %v465 = vunpack.c.l.b16 %v202
    %v466 = vunpack.c.l.b16 %v203
    %v467 = vunpack.c.l.b16 %v204
    %v468 = vunpack.c.l.b16 %v205
    %v469 = vunpack.c.l.b16 %v206
    %v470 = vunpack.c.l.b16 %v207
    %v471 = vunpack.c.l.b16 %v208
    %v472 = vunpack.c.l.b16 %v209
    %v473 = vunpack.c.l.b16 %v210
    %v474 = vunpack.c.l.b16 %v211
    %v475 = vunpack.c.l.b16 %v212
    %v476 = vunpack.c.l.b16 %v213
    %v477 = vunpack.c.l.b16 %v214
    %v478 = vunpack.c.l.b16 %v215
    %v479 = vunpack.c.l.b16 %v216
    %v480 = vunpack.c.l.b16 %v217
    %v481 = vunpack.c.l.b16 %v218
    %v482 = vunpack.c.l.b16 %v219
    %v483 = vunpack.c.l.b16 %v220
    %v484 = vunpack.c.l.b16 %v221
    %v485 = vpack.c.b16 %v358, %v357
    %v486 = vpack.c.b16 %v360, %v359
    %v487 = vpack.c.b16 %v362, %v361
    %v488 = vpack.c.b16 %v364, %v363
    %v489 = vpack.c.b16 %v366, %v365
    %v490 = vpack.c.b16 %v368, %v367
    %v491 = vpack.c.b16 %v370, %v369
    %v492 = vpack.c.b16 %v372, %v371
    %v493 = vpack.c.b16 %v374, %v373
    %v494 = vpack.c.b16 %v376, %v375
    %v495 = vpack.c.b16 %v378, %v377
    %v496 = vpack.c.b16 %v380, %v379
    %v497 = vpack.c.b16 %v382, %v381
    %v498 = vpack.c.b16 %v384, %v383
    %v499 = vpack.c.b16 %v386, %v385
    %v500 = vpack.c.b16 %v388, %v387
    %v501 = vpack.c.b16 %v390, %v389
    %v502 = vpack.c.b16 %v392, %v391
    %v503 = vpack.c.b16 %v394, %v393
    %v504 = vpack.c.b16 %v396, %v395
    %v505 = vpack.c.b16 %v398, %v397
    %v506 = vpack.c.b16 %v400, %v399
    %v507 = vpack.c.b16 %v402, %v401
    %v508 = vpack.c.b16 %v404, %v403
    %v509 = vpack.c.b16 %v406, %v405
    %v510 = vpack.c.b16 %v408, %v407
    %v511 = vpack.c.b16 %v410, %v409
    %v512 = vpack.c.b16 %v412, %v411
    %v513 = vpack.c.b16 %v414, %v413
    %v514 = vpack.c.b16 %v416, %v415
    %v515 = vpack.c.b16 %v418, %v417
    %v516 = vpack.c.b16 %v420, %v419
    %v517 = vpack.c.b16 %v422, %v421
    %v518 = vpack.c.b16 %v424, %v423
    %v519 = vpack.c.b16 %v426, %v425
    %v520 = vpack.c.b16 %v428, %v427
    %v521 = vpack.c.b16 %v430, %v429
    %v522 = vpack.c.b16 %v432, %v431
    %v523 = vpack.c.b16 %v434, %v433
    %v524 = vpack.c.b16 %v436, %v435
    %v525 = vpack.c.b16 %v438, %v437
    %v526 = vpack.c.b16 %v440, %v439
    %v527 = vpack.c.b16 %v442, %v441
    %v528 = vpack.c.b16 %v444, %v443
    %v529 = vpack.c.b16 %v446, %v445
    %v530 = vpack.c.b16 %v448, %v447
    %v531 = vpack.c.b16 %v450, %v449
    %v532 = vpack.c.b16 %v452, %v451
    %v533 = vpack.c.b16 %v454, %v453
    %v534 = vpack.c.b16 %v456, %v455
    %v535 = vpack.c.b16 %v458, %v457
    %v536 = vpack.c.b16 %v460, %v459
    %v537 = vpack.c.b16 %v462, %v461
    %v538 = vpack.c.b16 %v464, %v463
    %v539 = vpack.c.b16 %v466, %v465
    %v540 = vpack.c.b16 %v468, %v467
    %v541 = vpack.c.b16 %v470, %v469
    %v542 = vpack.c.b16 %v472, %v471
    %v543 = vpack.c.b16 %v474, %v473
    %v544 = vpack.c.b16 %v476, %v475
    %v545 = vpack.c.b16 %v478, %v477
    %v546 = vpack.c.b16 %v480, %v479
    %v547 = vpack.c.b16 %v482, %v481
    %v548 = vpack.c.b16 %v484, %v483
    %613 = vmatprep.subr.bf16.mxu0 0
    %614 = vmatpush1.bf16.msra.mxu0 %v485
    %615 = vmatprep.subr.bf16.mxu0 0
    %616 = vmatpush1.bf16.msra.mxu0 %v486
    %617 = vmatprep.subr.bf16.mxu0 0
    %618 = vmatpush1.bf16.msra.mxu0 %v487
    %619 = vmatprep.subr.bf16.mxu0 0
    %620 = vmatpush1.bf16.msra.mxu0 %v488
    %621 = vmatprep.subr.bf16.mxu0 0
    %622 = vmatpush1.bf16.msra.mxu0 %v489
    %623 = vmatprep.subr.bf16.mxu0 0
    %624 = vmatpush1.bf16.msra.mxu0 %v490
    %625 = vmatprep.subr.bf16.mxu0 0
    %626 = vmatpush1.bf16.msra.mxu0 %v491
    %627 = vmatprep.subr.bf16.mxu0 0
    %628 = vmatpush1.bf16.msra.mxu0 %v492
    %629 = vmatprep.subr.bf16.mxu0 0
    %630 = vmatpush1.bf16.msra.mxu0 %v493
    %631 = vmatprep.subr.bf16.mxu0 0
    %632 = vmatpush1.bf16.msra.mxu0 %v494
    %633 = vmatprep.subr.bf16.mxu0 0
    %634 = vmatpush1.bf16.msra.mxu0 %v495
    %635 = vmatprep.subr.bf16.mxu0 0
    %636 = vmatpush1.bf16.msra.mxu0 %v496
    %637 = vmatprep.subr.bf16.mxu0 0
    %638 = vmatpush1.bf16.msra.mxu0 %v497
    %639 = vmatprep.subr.bf16.mxu0 0
    %640 = vmatpush1.bf16.msra.mxu0 %v498
    %641 = vmatprep.subr.bf16.mxu0 0
    %642 = vmatpush1.bf16.msra.mxu0 %v499
    %643 = vmatprep.subr.bf16.mxu0 0
    %644 = vmatpush1.bf16.msra.mxu0 %v500
    %645 = vmatprep.mubr.bf16.mxu0 %v87
    %646 = vmatmul.mubr.bf16.gmra.mrb[0].mxu0 %v86
    %v647 = vpop.f32.mrb[0].mxu0
    %v648 = vadd.f32 %v227, %v647
    %v649 = vpop.f32.mrb[0].mxu0
    %v650 = vpop.f32.mrb[0].mxu0
    %v651 = vpop.f32.mrb[0].mxu0
    %652 = vdwg.mxu0
    %653 = vmatprep.subr.bf16.mxu0 0
    %654 = vmatpush1.bf16.msra.mxu0 %v501
    %655 = vmatprep.subr.bf16.mxu0 0
    %656 = vmatpush1.bf16.msra.mxu0 %v502
    %657 = vmatprep.subr.bf16.mxu0 0
    %658 = vmatpush1.bf16.msra.mxu0 %v503
    %659 = vmatprep.subr.bf16.mxu0 0
    %660 = vmatpush1.bf16.msra.mxu0 %v504
    %661 = vmatprep.subr.bf16.mxu0 0
    %662 = vmatpush1.bf16.msra.mxu0 %v505
    %663 = vmatprep.subr.bf16.mxu0 0
    %664 = vmatpush1.bf16.msra.mxu0 %v506
    %665 = vmatprep.subr.bf16.mxu0 0
    %666 = vmatpush1.bf16.msra.mxu0 %v507
    %667 = vmatprep.subr.bf16.mxu0 0
    %668 = vmatpush1.bf16.msra.mxu0 %v508
    %669 = vmatprep.subr.bf16.mxu0 0
    %670 = vmatpush1.bf16.msra.mxu0 %v509
    %671 = vmatprep.subr.bf16.mxu0 0
    %672 = vmatpush1.bf16.msra.mxu0 %v510
    %673 = vmatprep.subr.bf16.mxu0 0
    %674 = vmatpush1.bf16.msra.mxu0 %v511
    %675 = vmatprep.subr.bf16.mxu0 0
    %676 = vmatpush1.bf16.msra.mxu0 %v512
    %677 = vmatprep.subr.bf16.mxu0 0
    %678 = vmatpush1.bf16.msra.mxu0 %v513
    %679 = vmatprep.subr.bf16.mxu0 0
    %680 = vmatpush1.bf16.msra.mxu0 %v514
    %681 = vmatprep.subr.bf16.mxu0 0
    %682 = vmatpush1.bf16.msra.mxu0 %v515
    %683 = vmatprep.subr.bf16.mxu0 0
    %684 = vmatpush1.bf16.msra.mxu0 %v516
    %685 = vmatprep.mubr.bf16.mxu0 %v89
    %686 = vmatmul.mubr.bf16.gmra.mrb[0].mxu0 %v88
    %v687 = vpop.f32.mrb[0].mxu0
    %v688 = vadd.f32 %v648, %v687
    %v689 = vpop.f32.mrb[0].mxu0
    %v690 = vpop.f32.mrb[0].mxu0
    %v691 = vpop.f32.mrb[0].mxu0
    %692 = vdwg.mxu0
    %693 = vmatprep.subr.bf16.mxu0 0
    %694 = vmatpush1.bf16.msra.mxu0 %v517
    %695 = vmatprep.subr.bf16.mxu0 0
    %696 = vmatpush1.bf16.msra.mxu0 %v518
    %697 = vmatprep.subr.bf16.mxu0 0
    %698 = vmatpush1.bf16.msra.mxu0 %v519
    %699 = vmatprep.subr.bf16.mxu0 0
    %700 = vmatpush1.bf16.msra.mxu0 %v520
    %701 = vmatprep.subr.bf16.mxu0 0
    %702 = vmatpush1.bf16.msra.mxu0 %v521
    %703 = vmatprep.subr.bf16.mxu0 0
    %704 = vmatpush1.bf16.msra.mxu0 %v522
    %705 = vmatprep.subr.bf16.mxu0 0
    %706 = vmatpush1.bf16.msra.mxu0 %v523
    %707 = vmatprep.subr.bf16.mxu0 0
    %708 = vmatpush1.bf16.msra.mxu0 %v524
    %709 = vmatprep.subr.bf16.mxu0 0
    %710 = vmatpush1.bf16.msra.mxu0 %v525
    %711 = vmatprep.subr.bf16.mxu0 0
    %712 = vmatpush1.bf16.msra.mxu0 %v526
    %713 = vmatprep.subr.bf16.mxu0 0
    %714 = vmatpush1.bf16.msra.mxu0 %v527
    %715 = vmatprep.subr.bf16.mxu0 0
    %716 = vmatpush1.bf16.msra.mxu0 %v528
    %717 = vmatprep.subr.bf16.mxu0 0
    %718 = vmatpush1.bf16.msra.mxu0 %v529
    %719 = vmatprep.subr.bf16.mxu0 0
    %720 = vmatpush1.bf16.msra.mxu0 %v530
    %721 = vmatprep.subr.bf16.mxu0 0
    %722 = vmatpush1.bf16.msra.mxu0 %v531
    %723 = vmatprep.subr.bf16.mxu0 0
    %724 = vmatpush1.bf16.msra.mxu0 %v532
    %725 = vmatprep.mubr.bf16.mxu0 %v91
    %726 = vmatmul.mubr.bf16.gmra.mrb[0].mxu0 %v90
    %v727 = vpop.f32.mrb[0].mxu0
    %v728 = vadd.f32 %v688, %v727
    %v729 = vpop.f32.mrb[0].mxu0
    %v730 = vpop.f32.mrb[0].mxu0
    %v731 = vpop.f32.mrb[0].mxu0
    %732 = vdwg.mxu0
    %733 = vmatprep.subr.bf16.mxu0 0
    %734 = vmatpush1.bf16.msra.mxu0 %v533
    %735 = vmatprep.subr.bf16.mxu0 0
    %736 = vmatpush1.bf16.msra.mxu0 %v534
    %737 = vmatprep.subr.bf16.mxu0 0
    %738 = vmatpush1.bf16.msra.mxu0 %v535
    %739 = vmatprep.subr.bf16.mxu0 0
    %740 = vmatpush1.bf16.msra.mxu0 %v536
    %741 = vmatprep.subr.bf16.mxu0 0
    %742 = vmatpush1.bf16.msra.mxu0 %v537
    %743 = vmatprep.subr.bf16.mxu0 0
    %744 = vmatpush1.bf16.msra.mxu0 %v538
    %745 = vmatprep.subr.bf16.mxu0 0
    %746 = vmatpush1.bf16.msra.mxu0 %v539
    %747 = vmatprep.subr.bf16.mxu0 0
    %748 = vmatpush1.bf16.msra.mxu0 %v540
    %749 = vmatprep.subr.bf16.mxu0 0
    %750 = vmatpush1.bf16.msra.mxu0 %v541
    %751 = vmatprep.subr.bf16.mxu0 0
    %752 = vmatpush1.bf16.msra.mxu0 %v542
    %753 = vmatprep.subr.bf16.mxu0 0
    %754 = vmatpush1.bf16.msra.mxu0 %v543
    %755 = vmatprep.subr.bf16.mxu0 0
    %756 = vmatpush1.bf16.msra.mxu0 %v544
    %757 = vmatprep.subr.bf16.mxu0 0
    %758 = vmatpush1.bf16.msra.mxu0 %v545
    %759 = vmatprep.subr.bf16.mxu0 0
    %760 = vmatpush1.bf16.msra.mxu0 %v546
    %761 = vmatprep.subr.bf16.mxu0 0
    %762 = vmatpush1.bf16.msra.mxu0 %v547
    %763 = vmatprep.subr.bf16.mxu0 0
    %764 = vmatpush1.bf16.msra.mxu0 %v548
    %765 = vmatprep.mubr.bf16.mxu0 %v93
    %766 = vmatmul.mubr.bf16.gmra.mrb[0].mxu0 %v92
    %v767 = vpop.f32.mrb[0].mxu0
    %v768 = vadd.f32 %v728, %v767
    %v769 = vpop.f32.mrb[0].mxu0
    %v770 = vpop.f32.mrb[0].mxu0
    %v771 = vpop.f32.mrb[0].mxu0
    %772 = vdwg.mxu0
    %vm773 = vcmp.gt.f32.partialorder %v768, 0.0
    %v774 = vstv %s39
    %v775 = vmul.f32 %v774, %v768
    %v776 = vsel %vm773, %v768, %v775
    %v777 = vpack.c.bf16 %v776, %v776
    %v778 = vld [vmem:[%s3] sm:$0xf]
    %v779 = vld [vmem:[%s3 + $0x4] sm:$0xf]
    %v780 = vld [vmem:[%s3 + $0x8] sm:$0xf]
    %v781 = vld [vmem:[%s3 + $0xc] sm:$0xf]
    %v782 = vld [vmem:[%s3 + $0x10] sm:$0xf]
    %v783 = vld [vmem:[%s3 + $0x14] sm:$0xf]
    %v784 = vld [vmem:[%s3 + $0x18] sm:$0xf]
    %v785 = vld [vmem:[%s3 + $0x1c] sm:$0xf]
    %v786 = vld [vmem:[%s3 + $0x20] sm:$0xf]
    %v787 = vld [vmem:[%s3 + $0x24] sm:$0xf]
    %v788 = vld [vmem:[%s3 + $0x28] sm:$0xf]
    %v789 = vld [vmem:[%s3 + $0x2c] sm:$0xf]
    %v790 = vld [vmem:[%s3 + $0x30] sm:$0xf]
    %v791 = vld [vmem:[%s3 + $0x34] sm:$0xf]
    %v792 = vld [vmem:[%s3 + $0x38] sm:$0xf]
    %v793 = vld [vmem:[%s3 + $0x3c] sm:$0xf]
    %v794 = vld [vmem:[%s4] sm:$0x1]
    %v796 = vlaneseq
    %v797 = vshrl.u32 %v796, 7
    %v798 = vsub.s32 0, %v797
    %v799 = vrot.slane %v794, %v798
    %v817 = vunpack.c.l.b16 %v778
    %v818 = vunpack.c.l.b16 %v779
    %v819 = vunpack.c.l.b16 %v780
    %v820 = vunpack.c.l.b16 %v781
    %v821 = vunpack.c.l.b16 %v782
    %v822 = vunpack.c.l.b16 %v783
    %v823 = vunpack.c.l.b16 %v784
    %v824 = vunpack.c.l.b16 %v785
    %v825 = vunpack.c.l.b16 %v786
    %v826 = vunpack.c.l.b16 %v787
    %v827 = vunpack.c.l.b16 %v788
    %v828 = vunpack.c.l.b16 %v789
    %v829 = vunpack.c.l.b16 %v790
    %v830 = vunpack.c.l.b16 %v791
    %v831 = vunpack.c.l.b16 %v792
    %v832 = vunpack.c.l.b16 %v793
    %v833 = vpack.c.b16 %v818, %v817
    %v834 = vpack.c.b16 %v820, %v819
    %v835 = vpack.c.b16 %v822, %v821
    %v836 = vpack.c.b16 %v824, %v823
    %v837 = vpack.c.b16 %v826, %v825
    %v838 = vpack.c.b16 %v828, %v827
    %v839 = vpack.c.b16 %v830, %v829
    %v840 = vpack.c.b16 %v832, %v831
    %849 = vmatprep.subr.bf16.mxu0 0
    %850 = vmatpush1.bf16.msra.mxu0 %v833
    %851 = vmatprep.subr.bf16.mxu0 0
    %852 = vmatpush1.bf16.msra.mxu0 %v834
    %853 = vmatprep.subr.bf16.mxu0 0
    %854 = vmatpush1.bf16.msra.mxu0 %v835
    %855 = vmatprep.subr.bf16.mxu0 0
    %856 = vmatpush1.bf16.msra.mxu0 %v836
    %857 = vmatprep.subr.bf16.mxu0 0
    %858 = vmatpush1.bf16.msra.mxu0 %v837
    %859 = vmatprep.subr.bf16.mxu0 0
    %860 = vmatpush1.bf16.msra.mxu0 %v838
    %861 = vmatprep.subr.bf16.mxu0 0
    %862 = vmatpush1.bf16.msra.mxu0 %v839
    %863 = vmatprep.subr.bf16.mxu0 0
    %864 = vmatpush1.bf16.msra.mxu0 %v840
    %865 = vmatprep.subr.bf16.mxu0 0
    %866 = vmatpush1.bf16.msra.mxu0 0
    %867 = vmatprep.subr.bf16.mxu0 0
    %868 = vmatpush1.bf16.msra.mxu0 0
    %869 = vmatprep.subr.bf16.mxu0 0
    %870 = vmatpush1.bf16.msra.mxu0 0
    %871 = vmatprep.subr.bf16.mxu0 0
    %872 = vmatpush1.bf16.msra.mxu0 0
    %873 = vmatprep.subr.bf16.mxu0 0
    %874 = vmatpush1.bf16.msra.mxu0 0
    %875 = vmatprep.subr.bf16.mxu0 0
    %876 = vmatpush1.bf16.msra.mxu0 0
    %877 = vmatprep.subr.bf16.mxu0 0
    %878 = vmatpush1.bf16.msra.mxu0 0
    %879 = vmatprep.subr.bf16.mxu0 0
    %880 = vmatpush1.bf16.msra.mxu0 0
    %881 = vmatprep.mubr.bf16.mxu0 0
    %882 = vmatmul.mubr.bf16.gmra.mrb[0].mxu0 %v777
    %v883 = vpop.f32.mrb[0].mxu0
    %v884 = vadd.f32 %v799, %v883
    %v885 = vpop.f32.mrb[0].mxu0
    %v886 = vpop.f32.mrb[0].mxu0
    %v887 = vpop.f32.mrb[0].mxu0
    %888 = vdwg.mxu0
    %vm889 = vcmask 254976
    %890 = vst.msk [vmem:[%s6] sm:$0x3] %vm889, %v884
    // Predicated region
    $region30: #{two_layer_net_forward.1} parent=1 // pred_check
      _
    $region31: #{two_layer_net_forward.1} parent=1 // pred_check_branch
      %892 = sbr.rel (0) target = $region33
    $region32: #{two_layer_net_forward.1} parent=1 // pred_region
      _
    $region33: #{two_layer_net_forward.1} parent=1 // pred_fallthru
      _
    // Predicated region
    $region34: #{two_layer_net_forward.1} parent=1 // pred_check
      _
    $region35: #{two_layer_net_forward.1} parent=1 // pred_check_branch
      %894 = sbr.rel (0) target = $region37
    $region36: #{two_layer_net_forward.1} parent=1 // pred_region
      _
    $region37: #{two_layer_net_forward.1} parent=1 // pred_fallthru
      _
    %895 = vsyncpa [#allocation4], 1

</llo_original>
